<compile_context>
chip_gen: v5e
topology: v5e:2x2
jax: 0.10.0
libtpu: 0.0.40
codegen_flags: <defaults>
</compile_context>

<pallas_src>
import jax
import jax.numpy as jnp
from jax.experimental import pallas as pl
from jax.experimental.pallas import tpu as pltpu


def _round_up(x, m):
    return (x + m - 1) // m * m


def _pad2(a, shape):
    return jnp.pad(a, ((0, shape[0] - a.shape[0]), (0, shape[1] - a.shape[1])))


# ---------------------------------------------------------------------------
# One-time hardware introspection (generation-aware budgets).
# ---------------------------------------------------------------------------
def _tpu_generation():
    """Returns (per-core VMEM bytes, TensorCores per chip) with safe fallbacks."""
    vmem = 128 << 20
    n_tc = 1
    try:
        info = pltpu.get_tpu_info()
        vmem = int(getattr(info, "vmem_capacity_bytes", vmem))
    except Exception:
        pass
    try:
        kind = jax.devices()[0].device_kind.lower()
    except Exception:
        kind = ""
    if "v7" in kind:
        n_tc = 2
        vmem = min(vmem, 64 << 20)   # 64 MiB per TensorCore on v7x
    return vmem, n_tc


_VMEM_BYTES, _NUM_TC = _tpu_generation()


# ---------------------------------------------------------------------------
# One-time cached probe: can grid-invariant inputs be single-buffered?
# ---------------------------------------------------------------------------
_WEIGHT_PIPELINE_KWARGS = None


def _weight_pipeline_kwargs():
    global _WEIGHT_PIPELINE_KWARGS
    if _WEIGHT_PIPELINE_KWARGS is None:
        try:
            def k(a_ref, w_ref, o_ref):
                o_ref[...] = a_ref[...] + w_ref[...]

            probe = pl.pallas_call(
                k,
                out_shape=jax.ShapeDtypeStruct((16, 128), jnp.float32),
                grid=(2,),
                in_specs=[
                    pl.BlockSpec((8, 128), lambda i: (i, 0)),
                    pl.BlockSpec((8, 128), lambda i: (0, 0),
                                 pipeline_mode=pl.Buffered(1)),
                ],
                out_specs=pl.BlockSpec((8, 128), lambda i: (i, 0)),
            )
            jax.block_until_ready(
                probe(jnp.zeros((16, 128), jnp.float32),
                      jnp.zeros((8, 128), jnp.float32)))
            _WEIGHT_PIPELINE_KWARGS = {"pipeline_mode": pl.Buffered(1)}
        except Exception:
            _WEIGHT_PIPELINE_KWARGS = {}
    return _WEIGHT_PIPELINE_KWARGS


# ---------------------------------------------------------------------------
# Kernel: whole hot path fused. MXU operands stay in their (possibly bf16)
# storage dtype; accumulation + elementwise math are f32.
# ---------------------------------------------------------------------------
def mlp_kernel(x_ref, w1_ref, b1_ref, w2_ref, b2_ref, w3_ref, b3_ref, o_ref):
    x = x_ref[...]

    h1 = jnp.dot(x, w1_ref[...], preferred_element_type=jnp.float32)
    h1 = jnp.maximum(h1 + b1_ref[...].astype(jnp.float32), 0.0)

    h2 = jnp.dot(h1.astype(w2_ref.dtype), w2_ref[...],
                 preferred_element_type=jnp.float32)
    h2 = jnp.maximum(h2 + b2_ref[...].astype(jnp.float32), 0.0)

    out = jnp.dot(h2.astype(w3_ref.dtype), w3_ref[...],
                  preferred_element_type=jnp.float32)
    out = out + b3_ref[...].astype(jnp.float32)
    o_ref[...] = out.astype(o_ref.dtype)


# ---------------------------------------------------------------------------
# One-time parameter prep: cast + lane-pad hidden/output feature dims to 128.
# The layer-1 K dim (input features) is deliberately left unpadded.
# ---------------------------------------------------------------------------
def prepare_params(w1, b1, w2, b2, w3, b3, *, compute_dtype=jnp.bfloat16):
    cdt = jnp.dtype(compute_dtype)
    d_in = w1.shape[0]
    d1, d2, d_out = w1.shape[1], w2.shape[1], w3.shape[1]
    p1, p2, p_out = (_round_up(d, 128) for d in (d1, d2, d_out))
    prepared = (
        _pad2(w1.astype(cdt), (d_in, p1)),
        _pad2(b1.astype(cdt), (1, p1)),
        _pad2(w2.astype(cdt), (p1, p2)),
        _pad2(b2.astype(cdt), (1, p2)),
        _pad2(w3.astype(cdt), (p2, p_out)),
        _pad2(b3.astype(cdt), (1, p_out)),
    )
    meta = dict(d_in=d_in, d_out=d_out, p1=p1, p2=p2, p_out=p_out, cdt=cdt)
    return prepared, meta


def _choose_batch_tile(B, d_in, p1, p2, p_out, cdt_bytes, out_bytes, sub):
    """Largest batch tile fitting a generation-aware VMEM budget.
    Weights are single-buffered (grid-invariant); x/out are double-buffered."""
    budget = max(_VMEM_BYTES - (16 << 20), 16 << 20)     # compiler headroom
    weight_bytes = (d_in * p1 + p1 * p2 + p2 * p_out + p1 + p2 + p_out) * cdt_bytes
    b_align = _round_up(B, sub)
    best = sub
    for tb in (8, 16, 32, 64, 128, 256, 512, 1024, 2048):
        if tb % sub or tb > max(b_align, sub):
            continue
        act = 2 * tb * (d_in * cdt_bytes + p_out * out_bytes)  # x / out, 2-deep
        scratch = tb * (p1 + p2) * 4                           # f32 intermediates
        if weight_bytes + act + scratch <= budget:
            best = tb
    if _NUM_TC > 1:
        # v7x: even number of grid steps so both TensorCores get equal work.
        while best > sub and (pl.cdiv(B, best) < 2 or pl.cdiv(B, best) % 2):
            best = max(best // 2, sub)
    return best


def mlp_forward(x, prepared, meta, *, batch_tile=None):
    """x: [B, d_in]; prepared/meta from prepare_params(). Returns [B, d_out]."""
    w1p, b1p, w2p, b2p, w3p, b3p = prepared
    d_in, d_out = meta["d_in"], meta["d_out"]
    p1, p2, p_out = meta["p1"], meta["p2"], meta["p_out"]
    cdt = meta["cdt"]
    out_dtype = x.dtype
    B = x.shape[0]
    assert x.shape[1] == d_in

    sub = 16 if cdt.itemsize < 4 else 8          # bf16 packs 16 rows per vreg
    out_bytes = jnp.dtype(out_dtype).itemsize

    if batch_tile is None:
        tb = _choose_batch_tile(B, d_in, p1, p2, p_out, cdt.itemsize,
                                out_bytes, sub)
    else:
        tb = _round_up(max(batch_tile, sub), sub)
    tb = min(tb, _round_up(B, sub))

    grid = (pl.cdiv(B, tb),)   # no batch padding; ragged edge block is masked

    # VMEM plan: single-buffered weights + double-buffered x/out (+ headroom),
    # capped below the per-core physical VMEM of this generation.
    weight_bytes = (d_in * p1 + p1 * p2 + p2 * p_out + p1 + p2 + p_out) * cdt.itemsize
    act_bytes = 2 * tb * (d_in * cdt.itemsize + p_out * out_bytes)
    scratch_bytes = tb * (p1 + p2) * 4
    need = weight_bytes + act_bytes + scratch_bytes + (4 << 20)
    vmem_limit = int(min(max(need, 16 << 20), _VMEM_BYTES - (8 << 20)))

    xp = x.astype(cdt)   # the only per-call wrapper touch

    # TODO(synk): if the largest weight (p1*p2) outgrows the per-core VMEM
    # budget, add a trailing "arbitrary" grid axis over that matmul's N dim
    # (tile >= 256 on v6e/v7x, >= 128 on v5e) with a pl.when-initialised f32
    # VMEM accumulator instead of shrinking the batch tile.

    const = lambda i: (0, 0)     # weights/biases: same block every batch step
    wkw = _weight_pipeline_kwargs()
    wspec = lambda shape: pl.BlockSpec(shape, const, **wkw)

    out = pl.pallas_call(
        mlp_kernel,
        out_shape=jax.ShapeDtypeStruct((B, p_out), out_dtype),
        grid=grid,
        in_specs=[
            pl.BlockSpec((tb, d_in), lambda i: (i, 0)),
            wspec((d_in, p1)),
            wspec((1, p1)),
            wspec((p1, p2)),
            wspec((1, p2)),
            wspec((p2, p_out)),
            wspec((1, p_out)),
        ],
        out_specs=pl.BlockSpec((tb, p_out), lambda i: (i, 0)),
        compiler_params=pltpu.CompilerParams(
            dimension_semantics=("parallel",),
            vmem_limit_bytes=vmem_limit,
        ),
    )(xp, w1p, b1p, w2p, b2p, w3p, b3p)

    return out[:, :d_out]


# ---------------------------------------------------------------------------
# Parameter init (PyTorch Linear-style, stored transposed) and a JAX reference.
# ---------------------------------------------------------------------------
def init_params(key, input_size, output_size, dtype=jnp.float32):
    d1, d2, d3 = output_size * 3, output_size * 2, output_size
    k = jax.random.split(key, 6)

    def lin(kw, kb, fan_in, fan_out):
        bound = 1.0 / jnp.sqrt(fan_in)
        w = jax.random.uniform(kw, (fan_in, fan_out), dtype, -bound, bound)
        b = jax.random.uniform(kb, (1, fan_out), dtype, -bound, bound)
        return w, b

    w1, b1 = lin(k[0], k[1], input_size, d1)
    w2, b2 = lin(k[2], k[3], d1, d2)
    w3, b3 = lin(k[4], k[5], d2, d3)
    return w1, b1, w2, b2, w3, b3


def reference_forward(x, w1, b1, w2, b2, w3, b3):
    h1 = jnp.maximum(x @ w1 + b1, 0.0)
    h2 = jnp.maximum(h1 @ w2 + b2, 0.0)
    return h2 @ w3 + b3


if __name__ == "__main__":
    input_size = 32
    output_size = 16
    batch = 300   # deliberately ragged: exercises the masked edge block

    key = jax.random.PRNGKey(0)
    kx, kp = jax.random.split(key)
    x = jax.random.normal(kx, (batch, input_size), jnp.float32)
    params = init_params(kp, input_size, output_size)
    ref = reference_forward(x, *params)

    # Exact f32-operand path with an explicit 128-row batch tile (3 grid steps).
    prep_f32, meta_f32 = prepare_params(*params, compute_dtype=jnp.float32)
    out_f32 = jax.block_until_ready(
        mlp_forward(x, prep_f32, meta_f32, batch_tile=128))
    assert out_f32.shape == (batch, output_size)
    assert jnp.allclose(out_f32, ref, atol=1e-5, rtol=1e-5)

    # Default path: bf16 MXU operands, f32 accumulation, auto batch tile.
    prep_bf16, meta_bf16 = prepare_params(*params)
    out_bf16 = jax.block_until_ready(mlp_forward(x, prep_bf16, meta_bf16))
    assert out_bf16.shape == (batch, output_size)
    assert jnp.allclose(out_bf16, ref, atol=5e-2, rtol=5e-2)

    print("KERNEL_OK")
</pallas_src>

<mosaic_0001>
module attributes {stable_mosaic.version = 11 : i64} {
  func.func @k(%arg0: i32, %arg1: memref<8x128xf32, #tpu.memory_space<vmem>>, %arg2: memref<8x128xf32, #tpu.memory_space<vmem>>, %arg3: memref<8x128xf32, #tpu.memory_space<vmem>>) attributes {dimension_semantics = [#tpu.dimension_semantics<arbitrary>], iteration_bounds = array<i64: 2>, scalar_prefetch = 0 : i64, scratch_operands = 0 : i64, tpu.core_type = #tpu.core_type<tc>, window_params = [{transform_indices = @transform_0, window_bounds = array<i64: 8, 128>}, {pipeline_mode = #tpu.pipeline_mode<synchronous>, transform_indices = @transform_1, window_bounds = array<i64: 8, 128>}, {transform_indices = @transform_2, window_bounds = array<i64: 8, 128>}]} {
    %c0 = arith.constant 0 : index
    %c0_0 = arith.constant 0 : index
    %0 = vector.load %arg1[%c0, %c0_0] : memref<8x128xf32, #tpu.memory_space<vmem>>, vector<8x128xf32>
    %c0_1 = arith.constant 0 : index
    %c0_2 = arith.constant 0 : index
    %1 = vector.load %arg2[%c0_1, %c0_2] : memref<8x128xf32, #tpu.memory_space<vmem>>, vector<8x128xf32>
    %2 = arith.addf %0, %1 : vector<8x128xf32>
    %c0_3 = arith.constant 0 : index
    %c0_4 = arith.constant 0 : index
    %3 = vector.load %arg3[%c0_3, %c0_4] : memref<8x128xf32, #tpu.memory_space<vmem>>, vector<8x128xf32>
    tpu.vector_store %arg3[%c0_3, %c0_4], %2 {strides = array<i32>} : memref<8x128xf32, #tpu.memory_space<vmem>>, vector<8x128xf32>,
    return
  }
  func.func @transform_0(%arg0: i32) -> (i32, i32) {
    %c0_i32 = arith.constant 0 : i32
    %c0_i32_0 = arith.constant 0 : i32
    return %arg0, %c0_i32 : i32, i32
  }
  func.func @transform_1(%arg0: i32) -> (i32, i32) {
    %c0_i32 = arith.constant 0 : i32
    %c0_i32_0 = arith.constant 0 : i32
    %c0_i32_1 = arith.constant 0 : i32
    return %c0_i32, %c0_i32_0 : i32, i32
  }
  func.func @transform_2(%arg0: i32) -> (i32, i32) {
    %c0_i32 = arith.constant 0 : i32
    %c0_i32_0 = arith.constant 0 : i32
    return %arg0, %c0_i32 : i32, i32
  }
}

module attributes {stable_mosaic.version = 11 : i64} {
  func.func @mlp_kernel(%arg0: i32, %arg1: memref<128x32xf32, #tpu.memory_space<vmem>>, %arg2: memref<32x128xf32, #tpu.memory_space<vmem>>, %arg3: memref<1x128xf32, #tpu.memory_space<vmem>>, %arg4: memref<128x128xf32, #tpu.memory_space<vmem>>, %arg5: memref<1x128xf32, #tpu.memory_space<vmem>>, %arg6: memref<128x128xf32, #tpu.memory_space<vmem>>, %arg7: memref<1x128xf32, #tpu.memory_space<vmem>>, %arg8: memref<128x128xf32, #tpu.memory_space<vmem>>) attributes {dimension_semantics = [#tpu.dimension_semantics<parallel>], iteration_bounds = array<i64: 3>, scalar_prefetch = 0 : i64, scratch_operands = 0 : i64, tpu.core_type = #tpu.core_type<tc>, window_params = [{transform_indices = @transform_0, window_bounds = array<i64: 128, 32>}, {pipeline_mode = #tpu.pipeline_mode<synchronous>, transform_indices = @transform_1, window_bounds = array<i64: 32, 128>}, {pipeline_mode = #tpu.pipeline_mode<synchronous>, transform_indices = @transform_2, window_bounds = array<i64: 1, 128>}, {pipeline_mode = #tpu.pipeline_mode<synchronous>, transform_indices = @transform_3, window_bounds = array<i64: 128, 128>}, {pipeline_mode = #tpu.pipeline_mode<synchronous>, transform_indices = @transform_4, window_bounds = array<i64: 1, 128>}, {pipeline_mode = #tpu.pipeline_mode<synchronous>, transform_indices = @transform_5, window_bounds = array<i64: 128, 128>}, {pipeline_mode = #tpu.pipeline_mode<synchronous>, transform_indices = @transform_6, window_bounds = array<i64: 1, 128>}, {transform_indices = @transform_7, window_bounds = array<i64: 128, 128>}]} {
    %c0 = arith.constant 0 : index
    %c0_0 = arith.constant 0 : index
    %0 = vector.load %arg1[%c0, %c0_0] : memref<128x32xf32, #tpu.memory_space<vmem>>, vector<128x32xf32>
    %c0_1 = arith.constant 0 : index
    %c0_2 = arith.constant 0 : index
    %1 = vector.load %arg2[%c0_1, %c0_2] : memref<32x128xf32, #tpu.memory_space<vmem>>, vector<32x128xf32>
    %cst = arith.constant dense<0.000000e+00> : vector<128x128xf32>
    %2 = tpu.matmul %0, %1, %cst {dimension_numbers = #tpu.dot_dimension_numbers<[1], [0], [0], [1], [0, 0, 1, 1], [], []>} : vector<128x32xf32>, vector<32x128xf32>, vector<128x128xf32> -> vector<128x128xf32>
    %c0_3 = arith.constant 0 : index
    %c0_4 = arith.constant 0 : index
    %3 = vector.load %arg3[%c0_3, %c0_4] : memref<1x128xf32, #tpu.memory_space<vmem>>, vector<1x128xf32>
    %4 = vector.broadcast %3 : vector<1x128xf32> to vector<128x128xf32>
    %5 = arith.addf %2, %4 : vector<128x128xf32>
    %cst_5 = arith.constant 0.000000e+00 : f32
    %6 = vector.broadcast %cst_5 : f32 to vector<128x128xf32>
    %7 = arith.maximumf %5, %6 : vector<128x128xf32>
    %c0_6 = arith.constant 0 : index
    %c0_7 = arith.constant 0 : index
    %8 = vector.load %arg4[%c0_6, %c0_7] : memref<128x128xf32, #tpu.memory_space<vmem>>, vector<128x128xf32>
    %cst_8 = arith.constant dense<0.000000e+00> : vector<128x128xf32>
    %9 = tpu.matmul %7, %8, %cst_8 {dimension_numbers = #tpu.dot_dimension_numbers<[1], [0], [0], [1], [0, 0, 1, 1], [], []>} : vector<128x128xf32>, vector<128x128xf32>, vector<128x128xf32> -> vector<128x128xf32>
    %c0_9 = arith.constant 0 : index
    %c0_10 = arith.constant 0 : index
    %10 = vector.load %arg5[%c0_9, %c0_10] : memref<1x128xf32, #tpu.memory_space<vmem>>, vector<1x128xf32>
    %11 = vector.broadcast %10 : vector<1x128xf32> to vector<128x128xf32>
    %12 = arith.addf %9, %11 : vector<128x128xf32>
    %cst_11 = arith.constant 0.000000e+00 : f32
    %13 = vector.broadcast %cst_11 : f32 to vector<128x128xf32>
    %14 = arith.maximumf %12, %13 : vector<128x128xf32>
    %c0_12 = arith.constant 0 : index
    %c0_13 = arith.constant 0 : index
    %15 = vector.load %arg6[%c0_12, %c0_13] : memref<128x128xf32, #tpu.memory_space<vmem>>, vector<128x128xf32>
    %cst_14 = arith.constant dense<0.000000e+00> : vector<128x128xf32>
    %16 = tpu.matmul %14, %15, %cst_14 {dimension_numbers = #tpu.dot_dimension_numbers<[1], [0], [0], [1], [0, 0, 1, 1], [], []>} : vector<128x128xf32>, vector<128x128xf32>, vector<128x128xf32> -> vector<128x128xf32>
    %c0_15 = arith.constant 0 : index
    %c0_16 = arith.constant 0 : index
    %17 = vector.load %arg7[%c0_15, %c0_16] : memref<1x128xf32, #tpu.memory_space<vmem>>, vector<1x128xf32>
    %18 = vector.broadcast %17 : vector<1x128xf32> to vector<128x128xf32>
    %19 = arith.addf %16, %18 : vector<128x128xf32>
    %c0_17 = arith.constant 0 : index
    %c0_18 = arith.constant 0 : index
    %20 = vector.load %arg8[%c0_17, %c0_18] : memref<128x128xf32, #tpu.memory_space<vmem>>, vector<128x128xf32>
    tpu.vector_store %arg8[%c0_17, %c0_18], %19 {strides = array<i32>} : memref<128x128xf32, #tpu.memory_space<vmem>>, vector<128x128xf32>,
    return
  }
  func.func @transform_0(%arg0: i32) -> (i32, i32) {
    %c0_i32 = arith.constant 0 : i32
    %c0_i32_0 = arith.constant 0 : i32
    return %arg0, %c0_i32 : i32, i32
  }
  func.func @transform_1(%arg0: i32) -> (i32, i32) {
    %c0_i32 = arith.constant 0 : i32
    %c0_i32_0 = arith.constant 0 : i32
    %c0_i32_1 = arith.constant 0 : i32
    return %c0_i32, %c0_i32_0 : i32, i32
  }
  func.func @transform_2(%arg0: i32) -> (i32, i32) {
    %c0_i32 = arith.constant 0 : i32
    %c0_i32_0 = arith.constant 0 : i32
    %c0_i32_1 = arith.constant 0 : i32
    return %c0_i32, %c0_i32_0 : i32, i32
  }
  func.func @transform_3(%arg0: i32) -> (i32, i32) {
    %c0_i32 = arith.constant 0 : i32
    %c0_i32_0 = arith.constant 0 : i32
    %c0_i32_1 = arith.constant 0 : i32
    return %c0_i32, %c0_i32_0 : i32, i32
  }
  func.func @transform_4(%arg0: i32) -> (i32, i32) {
    %c0_i32 = arith.constant 0 : i32
    %c0_i32_0 = arith.constant 0 : i32
    %c0_i32_1 = arith.constant 0 : i32
    return %c0_i32, %c0_i32_0 : i32, i32
  }
  func.func @transform_5(%arg0: i32) -> (i32, i32) {
    %c0_i32 = arith.constant 0 : i32
    %c0_i32_0 = arith.constant 0 : i32
    %c0_i32_1 = arith.constant 0 : i32
    return %c0_i32, %c0_i32_0 : i32, i32
  }
  func.func @transform_6(%arg0: i32) -> (i32, i32) {
    %c0_i32 = arith.constant 0 : i32
    %c0_i32_0 = arith.constant 0 : i32
    %c0_i32_1 = arith.constant 0 : i32
    return %c0_i32, %c0_i32_0 : i32, i32
  }
  func.func @transform_7(%arg0: i32) -> (i32, i32) {
    %c0_i32 = arith.constant 0 : i32
    %c0_i32_0 = arith.constant 0 : i32
    return %arg0, %c0_i32 : i32, i32
  }
}

</mosaic_0001>

<llo_original>
// kernel: tpu_custom_call.1
$region0: #{tpu_custom_call.1}
  #allocation0 [shape = 'u32[]', space=smem, size = 0x4, offset = 0x4, fixed_abs, tag = 'smem constant byte address 0x4 - core index']
  #allocation1 [shape = 'u32[72,128]{1,0:T(1,128)}', space=vmem, size = 0x9000, scoped, tag = 'internal scratch']
  %s0 = inlined_call_operand.hbm [shape: f32[16,128], index: 0, kind: input, shape index: {}]
  %s1 = inlined_call_operand.hbm [shape: f32[8,128], index: 1, kind: input, shape index: {}]
  %s2 = inlined_call_operand.hbm [shape: f32[16,128], index: 2, kind: output, shape index: {}]
  %s3 = sld [smem:[#allocation0]]
  $region49: #{tpu_custom_call.1} parent=0
    _
  %s5 = ssub.s32 1, %s3
  %s6 = scalar_select 0, %s5, %s3
  $region1: #{tpu_custom_call.1} parent=0
    #allocation2 [shape = 'u8[8192]{0}', space=vmem, size = 0x2000, scoped, tag = 'input window, operand 0']
    #allocation3 [shape = 's32[2]{0}', space=sflag, size = 0x8, scoped, tag = 'scoped memory for tpu_custom_call.1']
    #allocation4 [shape = 's32[2]{0}', space=sflag, size = 0x8, scoped, tag = 'scoped memory for tpu_custom_call.1']
    #allocation5 [shape = 'u8[4096]{0}', space=vmem, size = 0x1000, scoped, tag = 'input window, operand 1, single buffered']
    #allocation6 [shape = 's32[1]{0}', space=sflag, size = 0x4, scoped, tag = 'scoped memory for tpu_custom_call.1']
    #allocation7 [shape = 'u8[8192]{0}', space=vmem, size = 0x2000, scoped, tag = 'output window, operand 0']
    %7 = vsyncpa [#allocation3], 0
    %s8 = scalar_lea.sflag [#allocation3], 1
    %9 = vsyncpa %s8, 0
    %10 = vsyncpa [#allocation6], 0
    %11 = vsyncpa [#allocation4], 0
    %s12 = scalar_lea.sflag [#allocation4], 1
    %13 = vsyncpa %s12, 0
    loop: start=0, step=1, limit=4
    $region2: #{tpu_custom_call.1} parent=1 // loop_pre_header
      _
    $region3: #{tpu_custom_call.1} parent=1 // loop_header
      %s15 = sphi 0, %s19
      %p16 = scmp.ge.s32.totalorder %s15, 4
      %s25 = sphi 0, %s27
      %s28 = sphi 0, %s25
      %s29 = sphi 0, %s28
      %s45 = sphi 0, %s29
      %s49 = sphi 0, %s49
      %s51 = sphi 0, %s49
      %s52 = sphi 0, %s51
      %s66 = sphi 0, %s52
      %s72 = sphi 0, %s74
      %s75 = sphi 0, %s72
      %s76 = sphi 0, %s75
      %s92 = sphi 0, %s76
    $region4: #{tpu_custom_call.1} parent=1 // loop_header_branch
      %18 = sbr.rel (%p16) target = $region8
    $region5: #{tpu_custom_call.1} parent=1 // loop_body
      %s20 = ssub.s32 %s15, 1
      %s21 = ssub.s32 %s15, 2
      %s22 = sadd.s32 %s15, 1
      %s23 = ssub.s32 %s15, %s22
      %p24 = scmp.eq.s32.totalorder %s23, 0
      %s26 = sadd.s32 %s25, 1
      %s27 = scalar_select %p24, %s25, %s26
      %p30 = pneg %p24
      %p31 = scmp.eq.s32.totalorder %s15, 1
      %p32 = por %p30, %p31
      %p33 = scmp.ne.s32.totalorder %s25, %s28
      %p34 = scmp.eq.s32.totalorder %s15, 0
      %p35 = por %p33, %p34
      %p36 = scmp.ne.s32.totalorder %s25, %s28
      %p37 = scmp.eq.s32.totalorder %s20, 1
      %p38 = por %p36, %p37
      %p39 = scmp.ne.s32.totalorder %s28, %s29
      %p40 = scmp.eq.s32.totalorder %s20, 0
      %p41 = por %p39, %p40
      %p42 = scmp.ne.s32.totalorder %s28, %s29
      %p43 = scmp.eq.s32.totalorder %s21, 1
      %p44 = por %p42, %p43
      %p46 = scmp.ne.s32.totalorder %s29, %s45
      %p47 = scmp.eq.s32.totalorder %s21, 0
      %p48 = por %p46, %p47
      %s50 = sadd.s32 %s49, 1
      %p53 = scmp.eq.s32.totalorder %s15, 1
      %p54 = scmp.ne.s32.totalorder %s49, %s51
      %p55 = scmp.eq.s32.totalorder %s15, 0
      %p56 = por %p54, %p55
      %p57 = scmp.ne.s32.totalorder %s49, %s51
      %p58 = scmp.eq.s32.totalorder %s20, 1
      %p59 = por %p57, %p58
      %p60 = scmp.ne.s32.totalorder %s51, %s52
      %p61 = scmp.eq.s32.totalorder %s20, 0
      %p62 = por %p60, %p61
      %p63 = scmp.ne.s32.totalorder %s51, %s52
      %p64 = scmp.eq.s32.totalorder %s21, 1
      %p65 = por %p63, %p64
      %p67 = scmp.ne.s32.totalorder %s52, %s66
      %p68 = scmp.eq.s32.totalorder %s21, 0
      %p69 = por %p67, %p68
      %s70 = ssub.s32 %s15, %s22
      %p71 = scmp.eq.s32.totalorder %s70, 0
      %s73 = sadd.s32 %s72, 1
      %s74 = scalar_select %p71, %s72, %s73
      %p77 = pneg %p71
      %p78 = scmp.eq.s32.totalorder %s15, 1
      %p79 = por %p77, %p78
      %p80 = scmp.ne.s32.totalorder %s72, %s75
      %p81 = scmp.eq.s32.totalorder %s15, 0
      %p82 = por %p80, %p81
      %p83 = scmp.ne.s32.totalorder %s72, %s75
      %p84 = scmp.eq.s32.totalorder %s20, 1
      %p85 = por %p83, %p84
      %p86 = scmp.ne.s32.totalorder %s75, %s76
      %p87 = scmp.eq.s32.totalorder %s20, 0
      %p88 = por %p86, %p87
      %p89 = scmp.ne.s32.totalorder %s75, %s76
      %p90 = scmp.eq.s32.totalorder %s21, 1
      %p91 = por %p89, %p90
      %p93 = scmp.ne.s32.totalorder %s76, %s92
      %p94 = scmp.eq.s32.totalorder %s21, 0
      %p95 = por %p93, %p94
      %p96 = scmp.le.s32.totalorder 1, %s15
      %p97 = scmp.lt.s32.totalorder %s15, 3
      %p98 = pnand %p96, %p97
      %p99 = pneg %p98
      // Predicated region
      $region9: #{tpu_custom_call.1} parent=5 // pred_check
        _
      $region10: #{tpu_custom_call.1} parent=5 // pred_check_branch
        %101 = sbr.rel (%p98) target = $region12
      $region11: #{tpu_custom_call.1} parent=5 // pred_region
        %s102 = ssub.s32 %s15, 1
        // Predicated region
        $region13: #{tpu_custom_call.1} parent=11 // pred_check
          %p103 = pneg %p62
        $region14: #{tpu_custom_call.1} parent=11 // pred_check_branch
          %105 = sbr.rel (%p103) target = $region16
        $region15: #{tpu_custom_call.1} parent=11 // pred_region
          %107 = vsyncadd [#allocation6], 0
          %s109 = sshll.u32 %s1, 4
          %s110 = int_to_ptr.hbm [resolvable:$true] %s109
          %s111 = sshll.u32 [#allocation5], 4
          %s112 = int_to_ptr.vmem [resolvable:$true] %s111
          %114 = dma.hbm_to_vmem [thread:$0]  %s110, 128, %s112, [#allocation6]
        $region16: #{tpu_custom_call.1} parent=11 // pred_fallthru
          _
      $region12: #{tpu_custom_call.1} parent=5 // pred_fallthru
        _
      %p115 = scmp.lt.s32.totalorder %s15, 2
      // Predicated region
      $region17: #{tpu_custom_call.1} parent=5 // pred_check
        %p116 = pneg %p115
      $region18: #{tpu_custom_call.1} parent=5 // pred_check_branch
        %118 = sbr.rel (%p116) target = $region20
      $region19: #{tpu_custom_call.1} parent=5 // pred_region
        // Predicated region
        $region21: #{tpu_custom_call.1} parent=19 // pred_check
          %p119 = pneg %p35
        $region22: #{tpu_custom_call.1} parent=19 // pred_check_branch
          %121 = sbr.rel (%p119) target = $region24
        $region23: #{tpu_custom_call.1} parent=19 // pred_region
          %s122 = sand.u32 %s25, 1
          %s123 = scalar_lea.sflag [#allocation3], %s122
          %s124 = sand.u32 %s25, 1
          %s125 = smul.addr %s124, 8
          %s126 = scalar_lea.vmem [#allocation2], %s125
          %128 = vsyncadd %s123, 0
          %s129 = smul.addr %s15, 8
          %s130 = scalar_lea.hbm %s0, %s129
          %s132 = sshll.u32 %s130, 4
          %s133 = int_to_ptr.hbm [resolvable:$true] %s132
          %s134 = sshll.u32 %s126, 4
          %s135 = int_to_ptr.vmem [resolvable:$true] %s134
          %137 = dma.hbm_to_vmem [thread:$0]  %s133, 128, %s135, %s123
        $region24: #{tpu_custom_call.1} parent=19 // pred_fallthru
          _
      $region20: #{tpu_custom_call.1} parent=5 // pred_fallthru
        _
      %p138 = scmp.le.s32.totalorder 1, %s15
      %p139 = scmp.lt.s32.totalorder %s15, 3
      %p140 = pnand %p138, %p139
      %p141 = pneg %p140
      // Predicated region
      $region25: #{tpu_custom_call.1} parent=5 // pred_check
        _
      $region26: #{tpu_custom_call.1} parent=5 // pred_check_branch
        %143 = sbr.rel (%p140) target = $region28
      $region27: #{tpu_custom_call.1} parent=5 // pred_region
        %s144 = ssub.s32 %s15, 1
        %s145 = sand.u32 %s28, 1
        %s146 = scalar_lea.sflag [#allocation3], %s145
        %s147 = sand.u32 %s28, 1
        %s148 = smul.addr %s147, 8
        %s149 = scalar_lea.vmem [#allocation2], %s148
        // Predicated region
        $region29: #{tpu_custom_call.1} parent=27 // pred_check
          %p150 = pneg %p41
        $region30: #{tpu_custom_call.1} parent=27 // pred_check_branch
          %152 = sbr.rel (%p150) target = $region32
        $region31: #{tpu_custom_call.1} parent=27 // pred_region
          %154 = dma.done %s146, 128
        $region32: #{tpu_custom_call.1} parent=27 // pred_fallthru
          _
        // Predicated region
        $region33: #{tpu_custom_call.1} parent=27 // pred_check
          %p155 = pneg %p62
        $region34: #{tpu_custom_call.1} parent=27 // pred_check_branch
          %157 = sbr.rel (%p155) target = $region36
        $region35: #{tpu_custom_call.1} parent=27 // pred_region
          %159 = dma.done [#allocation6], 128
        $region36: #{tpu_custom_call.1} parent=27 // pred_fallthru
          _
        %s160 = sand.u32 %s28, 1
        %s161 = scalar_lea.sflag [#allocation3], %s160
        %s162 = sand.u32 %s28, 1
        %s163 = smul.addr %s162, 8
        %s164 = scalar_lea.vmem [#allocation2], %s163
        %p165 = pneg %p41
        %p166 = pneg %p38
        %p167 = pneg %p62
        %p168 = pneg %p59
        %p169 = pneg %p88
        %p170 = pneg %p85
        %s171 = sand.u32 %s75, 1
        %s172 = scalar_lea.sflag [#allocation4], %s171
        %s173 = sand.u32 %s75, 1
        %s174 = smul.addr %s173, 8
        %s175 = scalar_lea.vmem [#allocation7], %s174
        %v176 = vld [vmem:[%s149] sm:$0xff]
        %v177 = vld [vmem:[#allocation5] sm:$0xff]
        %v178 = vadd.f32 %v176, %v177
        %179 = vst [vmem:[%s175] sm:$0xff] %v178
        %s180 = sand.u32 %s75, 1
        %s181 = scalar_lea.sflag [#allocation4], %s180
        %s182 = sand.u32 %s75, 1
        %s183 = smul.addr %s182, 8
        %s184 = scalar_lea.vmem [#allocation7], %s183
        // Predicated region
        $region37: #{tpu_custom_call.1} parent=27 // pred_check
          %p185 = pneg %p85
        $region38: #{tpu_custom_call.1} parent=27 // pred_check_branch
          %187 = sbr.rel (%p185) target = $region40
        $region39: #{tpu_custom_call.1} parent=27 // pred_region
          %189 = vsyncadd %s181, 0
          %s190 = smul.addr %s20, 8
          %s191 = scalar_lea.hbm %s2, %s190
          %s193 = sshll.u32 %s184, 4
          %s194 = int_to_ptr.vmem [resolvable:$true] %s193
          %s195 = sshll.u32 %s191, 4
          %s196 = int_to_ptr.hbm [resolvable:$true] %s195
          %198 = dma.vmem_to_hbm [thread:$0]  %s194, 128, %s196, %s181
        $region40: #{tpu_custom_call.1} parent=27 // pred_fallthru
          _
      $region28: #{tpu_custom_call.1} parent=5 // pred_fallthru
        _
      %p199 = scmp.le.s32.totalorder 2, %s15
      // Predicated region
      $region41: #{tpu_custom_call.1} parent=5 // pred_check
        %p200 = pneg %p199
      $region42: #{tpu_custom_call.1} parent=5 // pred_check_branch
        %202 = sbr.rel (%p200) target = $region44
      $region43: #{tpu_custom_call.1} parent=5 // pred_region
        %s203 = ssub.s32 %s15, 2
        // Predicated region
        $region45: #{tpu_custom_call.1} parent=43 // pred_check
          %p204 = pneg %p91
        $region46: #{tpu_custom_call.1} parent=43 // pred_check_branch
          %206 = sbr.rel (%p204) target = $region48
        $region47: #{tpu_custom_call.1} parent=43 // pred_region
          %s207 = sand.u32 %s76, 1
          %s208 = scalar_lea.sflag [#allocation4], %s207
          %s209 = sand.u32 %s76, 1
          %s210 = smul.addr %s209, 8
          %s211 = scalar_lea.vmem [#allocation7], %s210
          %213 = dma.done %s208, 128
        $region48: #{tpu_custom_call.1} parent=43 // pred_fallthru
          _
      $region44: #{tpu_custom_call.1} parent=5 // pred_fallthru
        _
    $region6: #{tpu_custom_call.1} parent=1 // loop_footer
      %s19 = sadd.s32 1, %s15
    $region7: #{tpu_custom_call.1} parent=1 // loop_footer_branch
      %14 = sbr.rel target = $region3
    $region8: #{tpu_custom_call.1} parent=1 // loop_exit
      _
    %214 = vsyncpa [#allocation3], 1
    %s215 = scalar_lea.sflag [#allocation3], 1
    %216 = vsyncpa %s215, 1
    %217 = vsyncpa [#allocation6], 1
    %218 = vsyncpa [#allocation4], 1
    %s219 = scalar_lea.sflag [#allocation4], 1
    %220 = vsyncpa %s219, 1

// kernel: tpu_custom_call.1
$region0: #{tpu_custom_call.1}
  #allocation0 [shape = 'u32[]', space=smem, size = 0x4, offset = 0x4, fixed_abs, tag = 'smem constant byte address 0x4 - core index']
  #allocation1 [shape = 'u32[72,128]{1,0:T(1,128)}', space=vmem, size = 0x9000, scoped, tag = 'internal scratch']
  %s0 = inlined_call_operand.vmem [shape: f32[300,32], index: 0, kind: input, shape index: {}]
  %s1 = inlined_call_operand.vmem [shape: f32[32,128], index: 1, kind: input, shape index: {}]
  %s2 = inlined_call_operand.vmem [shape: f32[1,128], index: 2, kind: input, shape index: {}]
  %s3 = inlined_call_operand.vmem [shape: f32[128,128], index: 3, kind: input, shape index: {}]
  %s4 = inlined_call_operand.vmem [shape: f32[1,128], index: 4, kind: input, shape index: {}]
  %s5 = inlined_call_operand.vmem [shape: f32[128,128], index: 5, kind: input, shape index: {}]
  %s6 = inlined_call_operand.vmem [shape: f32[1,128], index: 6, kind: input, shape index: {}]
  %s7 = inlined_call_operand.hbm [shape: f32[300,128], index: 7, kind: output, shape index: {}]
  %s8 = sld [smem:[#allocation0]]
  $region61: #{tpu_custom_call.1} parent=0
    _
  %s10 = ssub.s32 1, %s8
  %s11 = scalar_select 0, %s10, %s8
  $region1: #{tpu_custom_call.1} parent=0
    #allocation2 [shape = 'u8[131072]{0}', space=vmem, size = 0x20000, scoped, tag = 'output window, operand 0']
    #allocation3 [shape = 's32[2]{0}', space=sflag, size = 0x8, scoped, tag = 'scoped memory for tpu_custom_call.1']
    %12 = vsyncpa [#allocation3], 0
    %s13 = scalar_lea.sflag [#allocation3], 1
    %14 = vsyncpa %s13, 0
    loop: start=0, step=1, limit=5
    $region2: #{tpu_custom_call.1} parent=1 // loop_pre_header
      _
    $region3: #{tpu_custom_call.1} parent=1 // loop_header
      %s16 = sphi 0, %s20
      %p17 = scmp.ge.s32.totalorder %s16, 5
      %s26 = sphi 0, %s28
      %s29 = sphi 0, %s26
      %s30 = sphi 0, %s29
      %s46 = sphi 0, %s30
      %s50 = sphi 0, %s50
      %s52 = sphi 0, %s50
      %s53 = sphi 0, %s52
      %s67 = sphi 0, %s53
      %s71 = sphi 0, %s71
      %s73 = sphi 0, %s71
      %s74 = sphi 0, %s73
      %s88 = sphi 0, %s74
      %s92 = sphi 0, %s92
      %s94 = sphi 0, %s92
      %s95 = sphi 0, %s94
      %s109 = sphi 0, %s95
      %s113 = sphi 0, %s113
      %s115 = sphi 0, %s113
      %s116 = sphi 0, %s115
      %s130 = sphi 0, %s116
      %s134 = sphi 0, %s134
      %s136 = sphi 0, %s134
      %s137 = sphi 0, %s136
      %s151 = sphi 0, %s137
      %s155 = sphi 0, %s155
      %s157 = sphi 0, %s155
      %s158 = sphi 0, %s157
      %s172 = sphi 0, %s158
      %s178 = sphi 0, %s180
      %s181 = sphi 0, %s178
      %s182 = sphi 0, %s181
      %s198 = sphi 0, %s182
    $region4: #{tpu_custom_call.1} parent=1 // loop_header_branch
      %19 = sbr.rel (%p17) target = $region8
    $region5: #{tpu_custom_call.1} parent=1 // loop_body
      %s21 = ssub.s32 %s16, 1
      %s22 = ssub.s32 %s16, 2
      %s23 = sadd.s32 %s16, 1
      %s24 = ssub.s32 %s16, %s23
      %p25 = scmp.eq.s32.totalorder %s24, 0
      %s27 = sadd.s32 %s26, 1
      %s28 = scalar_select %p25, %s26, %s27
      %p31 = pneg %p25
      %p32 = scmp.eq.s32.totalorder %s16, 2
      %p33 = por %p31, %p32
      %p34 = scmp.ne.s32.totalorder %s26, %s29
      %p35 = scmp.eq.s32.totalorder %s16, 0
      %p36 = por %p34, %p35
      %p37 = scmp.ne.s32.totalorder %s26, %s29
      %p38 = scmp.eq.s32.totalorder %s21, 2
      %p39 = por %p37, %p38
      %p40 = scmp.ne.s32.totalorder %s29, %s30
      %p41 = scmp.eq.s32.totalorder %s21, 0
      %p42 = por %p40, %p41
      %p43 = scmp.ne.s32.totalorder %s29, %s30
      %p44 = scmp.eq.s32.totalorder %s22, 2
      %p45 = por %p43, %p44
      %p47 = scmp.ne.s32.totalorder %s30, %s46
      %p48 = scmp.eq.s32.totalorder %s22, 0
      %p49 = por %p47, %p48
      %s51 = sadd.s32 %s50, 1
      %p54 = scmp.eq.s32.totalorder %s16, 2
      %p55 = scmp.ne.s32.totalorder %s50, %s52
      %p56 = scmp.eq.s32.totalorder %s16, 0
      %p57 = por %p55, %p56
      %p58 = scmp.ne.s32.totalorder %s50, %s52
      %p59 = scmp.eq.s32.totalorder %s21, 2
      %p60 = por %p58, %p59
      %p61 = scmp.ne.s32.totalorder %s52, %s53
      %p62 = scmp.eq.s32.totalorder %s21, 0
      %p63 = por %p61, %p62
      %p64 = scmp.ne.s32.totalorder %s52, %s53
      %p65 = scmp.eq.s32.totalorder %s22, 2
      %p66 = por %p64, %p65
      %p68 = scmp.ne.s32.totalorder %s53, %s67
      %p69 = scmp.eq.s32.totalorder %s22, 0
      %p70 = por %p68, %p69
      %s72 = sadd.s32 %s71, 1
      %p75 = scmp.eq.s32.totalorder %s16, 2
      %p76 = scmp.ne.s32.totalorder %s71, %s73
      %p77 = scmp.eq.s32.totalorder %s16, 0
      %p78 = por %p76, %p77
      %p79 = scmp.ne.s32.totalorder %s71, %s73
      %p80 = scmp.eq.s32.totalorder %s21, 2
      %p81 = por %p79, %p80
      %p82 = scmp.ne.s32.totalorder %s73, %s74
      %p83 = scmp.eq.s32.totalorder %s21, 0
      %p84 = por %p82, %p83
      %p85 = scmp.ne.s32.totalorder %s73, %s74
      %p86 = scmp.eq.s32.totalorder %s22, 2
      %p87 = por %p85, %p86
      %p89 = scmp.ne.s32.totalorder %s74, %s88
      %p90 = scmp.eq.s32.totalorder %s22, 0
      %p91 = por %p89, %p90
      %s93 = sadd.s32 %s92, 1
      %p96 = scmp.eq.s32.totalorder %s16, 2
      %p97 = scmp.ne.s32.totalorder %s92, %s94
      %p98 = scmp.eq.s32.totalorder %s16, 0
      %p99 = por %p97, %p98
      %p100 = scmp.ne.s32.totalorder %s92, %s94
      %p101 = scmp.eq.s32.totalorder %s21, 2
      %p102 = por %p100, %p101
      %p103 = scmp.ne.s32.totalorder %s94, %s95
      %p104 = scmp.eq.s32.totalorder %s21, 0
      %p105 = por %p103, %p104
      %p106 = scmp.ne.s32.totalorder %s94, %s95
      %p107 = scmp.eq.s32.totalorder %s22, 2
      %p108 = por %p106, %p107
      %p110 = scmp.ne.s32.totalorder %s95, %s109
      %p111 = scmp.eq.s32.totalorder %s22, 0
      %p112 = por %p110, %p111
      %s114 = sadd.s32 %s113, 1
      %p117 = scmp.eq.s32.totalorder %s16, 2
      %p118 = scmp.ne.s32.totalorder %s113, %s115
      %p119 = scmp.eq.s32.totalorder %s16, 0
      %p120 = por %p118, %p119
      %p121 = scmp.ne.s32.totalorder %s113, %s115
      %p122 = scmp.eq.s32.totalorder %s21, 2
      %p123 = por %p121, %p122
      %p124 = scmp.ne.s32.totalorder %s115, %s116
      %p125 = scmp.eq.s32.totalorder %s21, 0
      %p126 = por %p124, %p125
      %p127 = scmp.ne.s32.totalorder %s115, %s116
      %p128 = scmp.eq.s32.totalorder %s22, 2
      %p129 = por %p127, %p128
      %p131 = scmp.ne.s32.totalorder %s116, %s130
      %p132 = scmp.eq.s32.totalorder %s22, 0
      %p133 = por %p131, %p132
      %s135 = sadd.s32 %s134, 1
      %p138 = scmp.eq.s32.totalorder %s16, 2
      %p139 = scmp.ne.s32.totalorder %s134, %s136
      %p140 = scmp.eq.s32.totalorder %s16, 0
      %p141 = por %p139, %p140
      %p142 = scmp.ne.s32.totalorder %s134, %s136
      %p143 = scmp.eq.s32.totalorder %s21, 2
      %p144 = por %p142, %p143
      %p145 = scmp.ne.s32.totalorder %s136, %s137
      %p146 = scmp.eq.s32.totalorder %s21, 0
      %p147 = por %p145, %p146
      %p148 = scmp.ne.s32.totalorder %s136, %s137
      %p149 = scmp.eq.s32.totalorder %s22, 2
      %p150 = por %p148, %p149
      %p152 = scmp.ne.s32.totalorder %s137, %s151
      %p153 = scmp.eq.s32.totalorder %s22, 0
      %p154 = por %p152, %p153
      %s156 = sadd.s32 %s155, 1
      %p159 = scmp.eq.s32.totalorder %s16, 2
      %p160 = scmp.ne.s32.totalorder %s155, %s157
      %p161 = scmp.eq.s32.totalorder %s16, 0
      %p162 = por %p160, %p161
      %p163 = scmp.ne.s32.totalorder %s155, %s157
      %p164 = scmp.eq.s32.totalorder %s21, 2
      %p165 = por %p163, %p164
      %p166 = scmp.ne.s32.totalorder %s157, %s158
      %p167 = scmp.eq.s32.totalorder %s21, 0
      %p168 = por %p166, %p167
      %p169 = scmp.ne.s32.totalorder %s157, %s158
      %p170 = scmp.eq.s32.totalorder %s22, 2
      %p171 = por %p169, %p170
      %p173 = scmp.ne.s32.totalorder %s158, %s172
      %p174 = scmp.eq.s32.totalorder %s22, 0
      %p175 = por %p173, %p174
      %s176 = ssub.s32 %s16, %s23
      %p177 = scmp.eq.s32.totalorder %s176, 0
      %s179 = sadd.s32 %s178, 1
      %s180 = scalar_select %p177, %s178, %s179
      %p183 = pneg %p177
      %p184 = scmp.eq.s32.totalorder %s16, 2
      %p185 = por %p183, %p184
      %p186 = scmp.ne.s32.totalorder %s178, %s181
      %p187 = scmp.eq.s32.totalorder %s16, 0
      %p188 = por %p186, %p187
      %p189 = scmp.ne.s32.totalorder %s178, %s181
      %p190 = scmp.eq.s32.totalorder %s21, 2
      %p191 = por %p189, %p190
      %p192 = scmp.ne.s32.totalorder %s181, %s182
      %p193 = scmp.eq.s32.totalorder %s21, 0
      %p194 = por %p192, %p193
      %p195 = scmp.ne.s32.totalorder %s181, %s182
      %p196 = scmp.eq.s32.totalorder %s22, 2
      %p197 = por %p195, %p196
      %p199 = scmp.ne.s32.totalorder %s182, %s198
      %p200 = scmp.eq.s32.totalorder %s22, 0
      %p201 = por %p199, %p200
      %p202 = scmp.le.s32.totalorder 1, %s16
      %p203 = scmp.lt.s32.totalorder %s16, 4
      %p204 = pnand %p202, %p203
      %p205 = pneg %p204
      // Predicated region
      $region9: #{tpu_custom_call.1} parent=5 // pred_check
        _
      $region10: #{tpu_custom_call.1} parent=5 // pred_check_branch
        %207 = sbr.rel (%p204) target = $region12
      $region11: #{tpu_custom_call.1} parent=5 // pred_region
        %s208 = ssub.s32 %s16, 1
        // Predicated region
        $region13: #{tpu_custom_call.1} parent=11 // pred_check
          %p209 = pneg %p63
        $region14: #{tpu_custom_call.1} parent=11 // pred_check_branch
          %211 = sbr.rel (%p209) target = $region16
        $region15: #{tpu_custom_call.1} parent=11 // pred_region
          _
        $region16: #{tpu_custom_call.1} parent=11 // pred_fallthru
          _
        // Predicated region
        $region17: #{tpu_custom_call.1} parent=11 // pred_check
          %p212 = pneg %p84
        $region18: #{tpu_custom_call.1} parent=11 // pred_check_branch
          %214 = sbr.rel (%p212) target = $region20
        $region19: #{tpu_custom_call.1} parent=11 // pred_region
          _
        $region20: #{tpu_custom_call.1} parent=11 // pred_fallthru
          _
        // Predicated region
        $region21: #{tpu_custom_call.1} parent=11 // pred_check
          %p215 = pneg %p105
        $region22: #{tpu_custom_call.1} parent=11 // pred_check_branch
          %217 = sbr.rel (%p215) target = $region24
        $region23: #{tpu_custom_call.1} parent=11 // pred_region
          _
        $region24: #{tpu_custom_call.1} parent=11 // pred_fallthru
          _
        // Predicated region
        $region25: #{tpu_custom_call.1} parent=11 // pred_check
          %p218 = pneg %p126
        $region26: #{tpu_custom_call.1} parent=11 // pred_check_branch
          %220 = sbr.rel (%p218) target = $region28
        $region27: #{tpu_custom_call.1} parent=11 // pred_region
          _
        $region28: #{tpu_custom_call.1} parent=11 // pred_fallthru
          _
        // Predicated region
        $region29: #{tpu_custom_call.1} parent=11 // pred_check
          %p221 = pneg %p147
        $region30: #{tpu_custom_call.1} parent=11 // pred_check_branch
          %223 = sbr.rel (%p221) target = $region32
        $region31: #{tpu_custom_call.1} parent=11 // pred_region
          _
        $region32: #{tpu_custom_call.1} parent=11 // pred_fallthru
          _
        // Predicated region
        $region33: #{tpu_custom_call.1} parent=11 // pred_check
          %p224 = pneg %p168
        $region34: #{tpu_custom_call.1} parent=11 // pred_check_branch
          %226 = sbr.rel (%p224) target = $region36
        $region35: #{tpu_custom_call.1} parent=11 // pred_region
          _
        $region36: #{tpu_custom_call.1} parent=11 // pred_fallthru
          _
      $region12: #{tpu_custom_call.1} parent=5 // pred_fallthru
        _
      %p227 = scmp.lt.s32.totalorder %s16, 3
      // Predicated region
      $region37: #{tpu_custom_call.1} parent=5 // pred_check
        %p228 = pneg %p227
      $region38: #{tpu_custom_call.1} parent=5 // pred_check_branch
        %230 = sbr.rel (%p228) target = $region40
      $region39: #{tpu_custom_call.1} parent=5 // pred_region
        // Predicated region
        $region41: #{tpu_custom_call.1} parent=39 // pred_check
          %p231 = pneg %p36
        $region42: #{tpu_custom_call.1} parent=39 // pred_check_branch
          %233 = sbr.rel (%p231) target = $region44
        $region43: #{tpu_custom_call.1} parent=39 // pred_region
          %s234 = smul.u32 16, %s16
          %s235 = ssub.s32 38, %s234
          %p236 = scmp.lt.s32.totalorder %s235, 16
          %s237 = scalar_select %p236, %s235, 16
          %s238 = smul.u32 8, %s237
          %p239 = scmp.lt.s32.totalorder %s234, 37
          %s240 = scalar_select %p239, %s234, 37
          %s241 = smul.addr %s240, 8
          %s242 = scalar_lea.vmem %s0, %s241
          %s243 = smul.u32 16, %s16
          %s244 = ssub.s32 38, %s243
          %p245 = scmp.lt.s32.totalorder %s244, 16
          %s246 = scalar_select %p245, %s244, 16
          %s247 = smul.u32 8, %s246
        $region44: #{tpu_custom_call.1} parent=39 // pred_fallthru
          _
      $region40: #{tpu_custom_call.1} parent=5 // pred_fallthru
        _
      %p248 = scmp.le.s32.totalorder 1, %s16
      %p249 = scmp.lt.s32.totalorder %s16, 4
      %p250 = pnand %p248, %p249
      %p251 = pneg %p250
      // Predicated region
      $region45: #{tpu_custom_call.1} parent=5 // pred_check
        _
      $region46: #{tpu_custom_call.1} parent=5 // pred_check_branch
        %253 = sbr.rel (%p250) target = $region48
      $region47: #{tpu_custom_call.1} parent=5 // pred_region
        %s254 = ssub.s32 %s16, 1
        %s255 = smul.u32 16, %s21
        %s256 = ssub.s32 38, %s255
        %p257 = scmp.lt.s32.totalorder %s256, 16
        %s258 = scalar_select %p257, %s256, 16
        %s259 = smul.u32 8, %s258
        %p260 = scmp.lt.s32.totalorder %s255, 37
        %s261 = scalar_select %p260, %s255, 37
        %s262 = smul.addr %s261, 8
        %s263 = scalar_lea.vmem %s0, %s262
        %p264 = pneg %p42
        %p265 = pneg %p39
        %p266 = pneg %p63
        %p267 = pneg %p60
        %p268 = pneg %p84
        %p269 = pneg %p81
        %p270 = pneg %p105
        %p271 = pneg %p102
        %p272 = pneg %p126
        %p273 = pneg %p123
        %p274 = pneg %p147
        %p275 = pneg %p144
        %p276 = pneg %p168
        %p277 = pneg %p165
        %p278 = pneg %p194
        %p279 = pneg %p191
        %s280 = sand.u32 %s181, 1
        %s281 = scalar_lea.sflag [#allocation3], %s280
        %s282 = sand.u32 %s181, 1
        %s283 = smul.addr %s282, 128
        %s284 = scalar_lea.vmem [#allocation2], %s283
        %s285 = smul.u32 16, %s21
        %s286 = ssub.s32 38, %s285
        %p287 = scmp.lt.s32.totalorder %s286, 16
        %s288 = scalar_select %p287, %s286, 16
        %s289 = smul.u32 8, %s288
        %p290 = scmp.lt.s32.totalorder %s285, 37
        %s291 = scalar_select %p290, %s285, 37
        %s292 = smul.addr %s291, 8
        %s293 = scalar_lea.vmem %s0, %s292
        %s294 = smul.u32 16, %s21
        %s295 = ssub.s32 38, %s294
        %p296 = scmp.lt.s32.totalorder %s295, 16
        %s297 = scalar_select %p296, %s295, 16
        %s298 = smul.u32 8, %s297
        %s299 = smul.u32 16, %s21
        %s300 = ssub.s32 38, %s299
        %p301 = scmp.lt.s32.totalorder %s300, 16
        %s302 = scalar_select %p301, %s300, 16
        %s303 = smul.u32 8, %s302
        %v304 = vld [vmem:[%s293] sm:$0xff]
        %v305 = vld [vmem:[%s293 + $0x8] sm:$0xff]
        %v306 = vld [vmem:[%s293 + $0x10] sm:$0xff]
        %v307 = vld [vmem:[%s293 + $0x18] sm:$0xff]
        %v308 = vld [vmem:[%s293 + $0x20] sm:$0xff]
        %v309 = vld [vmem:[%s293 + $0x28] sm:$0xff]
        %v310 = vld [vmem:[%s293 + $0x30] sm:$0xff]
        %v311 = vld [vmem:[%s293 + $0x38] sm:$0xff]
        %v312 = vld [vmem:[%s293 + $0x40] sm:$0xff]
        %v313 = vld [vmem:[%s293 + $0x48] sm:$0xff]
        %v314 = vld [vmem:[%s293 + $0x50] sm:$0xff]
        %v315 = vld [vmem:[%s293 + $0x58] sm:$0xff]
        %v316 = vld [vmem:[%s293 + $0x60] sm:$0xff]
        %v317 = vld [vmem:[%s293 + $0x68] sm:$0xff]
        %v318 = vld [vmem:[%s293 + $0x70] sm:$0xff]
        %v319 = vld [vmem:[%s293 + $0x78] sm:$0xff]
        %v320 = vld [vmem:[%s1] sm:$0xff]
        %v321 = vld [vmem:[%s1 + $0x8] sm:$0xff]
        %v322 = vld [vmem:[%s1 + $0x10] sm:$0xff]
        %v323 = vld [vmem:[%s1 + $0x18] sm:$0xff]
        %v324 = vld [vmem:[%s2] sm:$0x1]
        %v326 = vperm.slane %v324, 0
        %vm328 = vcmask 261120
        %v330 = vsel %vm328, %v304, 0
        %v333 = vsel %vm328, %v305, 0
        %v336 = vsel %vm328, %v306, 0
        %v339 = vsel %vm328, %v307, 0
        %v342 = vsel %vm328, %v308, 0
        %v345 = vsel %vm328, %v309, 0
        %v348 = vsel %vm328, %v310, 0
        %v351 = vsel %vm328, %v311, 0
        %v354 = vsel %vm328, %v312, 0
        %v357 = vsel %vm328, %v313, 0
        %v360 = vsel %vm328, %v314, 0
        %v363 = vsel %vm328, %v315, 0
        %v366 = vsel %vm328, %v316, 0
        %v369 = vsel %vm328, %v317, 0
        %v372 = vsel %vm328, %v318, 0
        %v375 = vsel %vm328, %v319, 0
        %377 = vmatpush.msra.mxu0 0.0
        %378 = vmatpush.msra.mxu0 0.0
        %379 = vmatpush.msra.mxu0 0.0
        %380 = vmatpush.msra.mxu0 0.0
        %381 = vmatpush.msra.mxu0 0.0
        %382 = vmatpush.msra.mxu0 0.0
        %383 = vmatpush.msra.mxu0 0.0
        %384 = vmatpush.msra.mxu0 0.0
        %385 = vmatpush.msra.mxu0 0.0
        %386 = vmatpush.msra.mxu0 0.0
        %387 = vmatpush.msra.mxu0 0.0
        %388 = vmatpush.msra.mxu0 0.0
        %389 = vmatpush.msra.mxu0 %v323
        %390 = vmatpush.msra.mxu0 %v322
        %391 = vmatpush.msra.mxu0 %v321
        %392 = vmatpush.msra.mxu0 %v320
        %393 = vmatmul.f32.gmra.mxu0 %v330
        %v394 = vpop.f32.mrf.mxu0
        %v395 = vadd.f32 %v326, %v394
        %396 = vmatmul.f32.gmra.mxu0 %v333
        %v397 = vpop.f32.mrf.mxu0
        %v398 = vadd.f32 %v326, %v397
        %399 = vmatmul.f32.gmra.mxu0 %v336
        %v400 = vpop.f32.mrf.mxu0
        %v401 = vadd.f32 %v326, %v400
        %402 = vmatmul.f32.gmra.mxu0 %v339
        %v403 = vpop.f32.mrf.mxu0
        %v404 = vadd.f32 %v326, %v403
        %405 = vmatmul.f32.gmra.mxu0 %v342
        %v406 = vpop.f32.mrf.mxu0
        %v407 = vadd.f32 %v326, %v406
        %408 = vmatmul.f32.gmra.mxu0 %v345
        %v409 = vpop.f32.mrf.mxu0
        %v410 = vadd.f32 %v326, %v409
        %411 = vmatmul.f32.gmra.mxu0 %v348
        %v412 = vpop.f32.mrf.mxu0
        %v413 = vadd.f32 %v326, %v412
        %414 = vmatmul.f32.gmra.mxu0 %v351
        %v415 = vpop.f32.mrf.mxu0
        %v416 = vadd.f32 %v326, %v415
        %417 = vmatmul.f32.gmra.mxu0 %v354
        %v418 = vpop.f32.mrf.mxu0
        %v419 = vadd.f32 %v326, %v418
        %420 = vmatmul.f32.gmra.mxu0 %v357
        %v421 = vpop.f32.mrf.mxu0
        %v422 = vadd.f32 %v326, %v421
        %423 = vmatmul.f32.gmra.mxu0 %v360
        %v424 = vpop.f32.mrf.mxu0
        %v425 = vadd.f32 %v326, %v424
        %426 = vmatmul.f32.gmra.mxu0 %v363
        %v427 = vpop.f32.mrf.mxu0
        %v428 = vadd.f32 %v326, %v427
        %429 = vmatmul.f32.gmra.mxu0 %v366
        %v430 = vpop.f32.mrf.mxu0
        %v431 = vadd.f32 %v326, %v430
        %432 = vmatmul.f32.gmra.mxu0 %v369
        %v433 = vpop.f32.mrf.mxu0
        %v434 = vadd.f32 %v326, %v433
        %435 = vmatmul.f32.gmra.mxu0 %v372
        %v436 = vpop.f32.mrf.mxu0
        %v437 = vadd.f32 %v326, %v436
        %438 = vmatmul.f32.gmra.mxu0 %v375
        %v439 = vpop.f32.mrf.mxu0
        %v440 = vadd.f32 %v326, %v439
        %441 = vdwg.mxu0
        %v442 = vmax.f32 %v395, 0.0
        %v443 = vmax.f32 %v398, 0.0
        %v444 = vmax.f32 %v401, 0.0
        %v445 = vmax.f32 %v404, 0.0
        %v446 = vmax.f32 %v407, 0.0
        %v447 = vmax.f32 %v410, 0.0
        %v448 = vmax.f32 %v413, 0.0
        %v449 = vmax.f32 %v416, 0.0
        %v450 = vmax.f32 %v419, 0.0
        %v451 = vmax.f32 %v422, 0.0
        %v452 = vmax.f32 %v425, 0.0
        %v453 = vmax.f32 %v428, 0.0
        %v454 = vmax.f32 %v431, 0.0
        %v455 = vmax.f32 %v434, 0.0
        %v456 = vmax.f32 %v437, 0.0
        %v457 = vmax.f32 %v440, 0.0
        %v458 = vld [vmem:[%s3] sm:$0xff]
        %v459 = vld [vmem:[%s3 + $0x8] sm:$0xff]
        %v460 = vld [vmem:[%s3 + $0x10] sm:$0xff]
        %v461 = vld [vmem:[%s3 + $0x18] sm:$0xff]
        %v462 = vld [vmem:[%s3 + $0x20] sm:$0xff]
        %v463 = vld [vmem:[%s3 + $0x28] sm:$0xff]
        %v464 = vld [vmem:[%s3 + $0x30] sm:$0xff]
        %v465 = vld [vmem:[%s3 + $0x38] sm:$0xff]
        %v466 = vld [vmem:[%s3 + $0x40] sm:$0xff]
        %v467 = vld [vmem:[%s3 + $0x48] sm:$0xff]
        %v468 = vld [vmem:[%s3 + $0x50] sm:$0xff]
        %v469 = vld [vmem:[%s3 + $0x58] sm:$0xff]
        %v470 = vld [vmem:[%s3 + $0x60] sm:$0xff]
        %v471 = vld [vmem:[%s3 + $0x68] sm:$0xff]
        %v472 = vld [vmem:[%s3 + $0x70] sm:$0xff]
        %v473 = vld [vmem:[%s3 + $0x78] sm:$0xff]
        %v474 = vld [vmem:[%s4] sm:$0x1]
        %v476 = vperm.slane %v474, 0
        %478 = vmatpush.msra.mxu0 %v473
        %479 = vmatpush.msra.mxu0 %v472
        %480 = vmatpush.msra.mxu0 %v471
        %481 = vmatpush.msra.mxu0 %v470
        %482 = vmatpush.msra.mxu0 %v469
        %483 = vmatpush.msra.mxu0 %v468
        %484 = vmatpush.msra.mxu0 %v467
        %485 = vmatpush.msra.mxu0 %v466
        %486 = vmatpush.msra.mxu0 %v465
        %487 = vmatpush.msra.mxu0 %v464
        %488 = vmatpush.msra.mxu0 %v463
        %489 = vmatpush.msra.mxu0 %v462
        %490 = vmatpush.msra.mxu0 %v461
        %491 = vmatpush.msra.mxu0 %v460
        %492 = vmatpush.msra.mxu0 %v459
        %493 = vmatpush.msra.mxu0 %v458
        %494 = vmatmul.f32.gmra.mxu0 %v442
        %v495 = vpop.f32.mrf.mxu0
        %v496 = vadd.f32 %v476, %v495
        %497 = vmatmul.f32.gmra.mxu0 %v443
        %v498 = vpop.f32.mrf.mxu0
        %v499 = vadd.f32 %v476, %v498
        %500 = vmatmul.f32.gmra.mxu0 %v444
        %v501 = vpop.f32.mrf.mxu0
        %v502 = vadd.f32 %v476, %v501
        %503 = vmatmul.f32.gmra.mxu0 %v445
        %v504 = vpop.f32.mrf.mxu0
        %v505 = vadd.f32 %v476, %v504
        %506 = vmatmul.f32.gmra.mxu0 %v446
        %v507 = vpop.f32.mrf.mxu0
        %v508 = vadd.f32 %v476, %v507
        %509 = vmatmul.f32.gmra.mxu0 %v447
        %v510 = vpop.f32.mrf.mxu0
        %v511 = vadd.f32 %v476, %v510
        %512 = vmatmul.f32.gmra.mxu0 %v448
        %v513 = vpop.f32.mrf.mxu0
        %v514 = vadd.f32 %v476, %v513
        %515 = vmatmul.f32.gmra.mxu0 %v449
        %v516 = vpop.f32.mrf.mxu0
        %v517 = vadd.f32 %v476, %v516
        %518 = vmatmul.f32.gmra.mxu0 %v450
        %v519 = vpop.f32.mrf.mxu0
        %v520 = vadd.f32 %v476, %v519
        %521 = vmatmul.f32.gmra.mxu0 %v451
        %v522 = vpop.f32.mrf.mxu0
        %v523 = vadd.f32 %v476, %v522
        %524 = vmatmul.f32.gmra.mxu0 %v452
        %v525 = vpop.f32.mrf.mxu0
        %v526 = vadd.f32 %v476, %v525
        %527 = vmatmul.f32.gmra.mxu0 %v453
        %v528 = vpop.f32.mrf.mxu0
        %v529 = vadd.f32 %v476, %v528
        %530 = vmatmul.f32.gmra.mxu0 %v454
        %v531 = vpop.f32.mrf.mxu0
        %v532 = vadd.f32 %v476, %v531
        %533 = vmatmul.f32.gmra.mxu0 %v455
        %v534 = vpop.f32.mrf.mxu0
        %v535 = vadd.f32 %v476, %v534
        %536 = vmatmul.f32.gmra.mxu0 %v456
        %v537 = vpop.f32.mrf.mxu0
        %v538 = vadd.f32 %v476, %v537
        %539 = vmatmul.f32.gmra.mxu0 %v457
        %v540 = vpop.f32.mrf.mxu0
        %v541 = vadd.f32 %v476, %v540
        %542 = vdwg.mxu0
        %v543 = vmax.f32 %v496, 0.0
        %v544 = vmax.f32 %v499, 0.0
        %v545 = vmax.f32 %v502, 0.0
        %v546 = vmax.f32 %v505, 0.0
        %v547 = vmax.f32 %v508, 0.0
        %v548 = vmax.f32 %v511, 0.0
        %v549 = vmax.f32 %v514, 0.0
        %v550 = vmax.f32 %v517, 0.0
        %v551 = vmax.f32 %v520, 0.0
        %v552 = vmax.f32 %v523, 0.0
        %v553 = vmax.f32 %v526, 0.0
        %v554 = vmax.f32 %v529, 0.0
        %v555 = vmax.f32 %v532, 0.0
        %v556 = vmax.f32 %v535, 0.0
        %v557 = vmax.f32 %v538, 0.0
        %v558 = vmax.f32 %v541, 0.0
        %v559 = vld [vmem:[%s5] sm:$0xff]
        %v560 = vld [vmem:[%s5 + $0x8] sm:$0xff]
        %v561 = vld [vmem:[%s5 + $0x10] sm:$0xff]
        %v562 = vld [vmem:[%s5 + $0x18] sm:$0xff]
        %v563 = vld [vmem:[%s5 + $0x20] sm:$0xff]
        %v564 = vld [vmem:[%s5 + $0x28] sm:$0xff]
        %v565 = vld [vmem:[%s5 + $0x30] sm:$0xff]
        %v566 = vld [vmem:[%s5 + $0x38] sm:$0xff]
        %v567 = vld [vmem:[%s5 + $0x40] sm:$0xff]
        %v568 = vld [vmem:[%s5 + $0x48] sm:$0xff]
        %v569 = vld [vmem:[%s5 + $0x50] sm:$0xff]
        %v570 = vld [vmem:[%s5 + $0x58] sm:$0xff]
        %v571 = vld [vmem:[%s5 + $0x60] sm:$0xff]
        %v572 = vld [vmem:[%s5 + $0x68] sm:$0xff]
        %v573 = vld [vmem:[%s5 + $0x70] sm:$0xff]
        %v574 = vld [vmem:[%s5 + $0x78] sm:$0xff]
        %v575 = vld [vmem:[%s6] sm:$0x1]
        %v577 = vperm.slane %v575, 0
        %579 = vmatpush.msra.mxu0 %v574
        %580 = vmatpush.msra.mxu0 %v573
        %581 = vmatpush.msra.mxu0 %v572
        %582 = vmatpush.msra.mxu0 %v571
        %583 = vmatpush.msra.mxu0 %v570
        %584 = vmatpush.msra.mxu0 %v569
        %585 = vmatpush.msra.mxu0 %v568
        %586 = vmatpush.msra.mxu0 %v567
        %587 = vmatpush.msra.mxu0 %v566
        %588 = vmatpush.msra.mxu0 %v565
        %589 = vmatpush.msra.mxu0 %v564
        %590 = vmatpush.msra.mxu0 %v563
        %591 = vmatpush.msra.mxu0 %v562
        %592 = vmatpush.msra.mxu0 %v561
        %593 = vmatpush.msra.mxu0 %v560
        %594 = vmatpush.msra.mxu0 %v559
        %595 = vmatmul.f32.gmra.mxu0 %v543
        %v596 = vpop.f32.mrf.mxu0
        %v597 = vadd.f32 %v577, %v596
        %598 = vmatmul.f32.gmra.mxu0 %v544
        %v599 = vpop.f32.mrf.mxu0
        %v600 = vadd.f32 %v577, %v599
        %601 = vmatmul.f32.gmra.mxu0 %v545
        %v602 = vpop.f32.mrf.mxu0
        %v603 = vadd.f32 %v577, %v602
        %604 = vmatmul.f32.gmra.mxu0 %v546
        %v605 = vpop.f32.mrf.mxu0
        %v606 = vadd.f32 %v577, %v605
        %607 = vmatmul.f32.gmra.mxu0 %v547
        %v608 = vpop.f32.mrf.mxu0
        %v609 = vadd.f32 %v577, %v608
        %610 = vmatmul.f32.gmra.mxu0 %v548
        %v611 = vpop.f32.mrf.mxu0
        %v612 = vadd.f32 %v577, %v611
        %613 = vmatmul.f32.gmra.mxu0 %v549
        %v614 = vpop.f32.mrf.mxu0
        %v615 = vadd.f32 %v577, %v614
        %616 = vmatmul.f32.gmra.mxu0 %v550
        %v617 = vpop.f32.mrf.mxu0
        %v618 = vadd.f32 %v577, %v617
        %619 = vmatmul.f32.gmra.mxu0 %v551
        %v620 = vpop.f32.mrf.mxu0
        %v621 = vadd.f32 %v577, %v620
        %622 = vmatmul.f32.gmra.mxu0 %v552
        %v623 = vpop.f32.mrf.mxu0
        %v624 = vadd.f32 %v577, %v623
        %625 = vmatmul.f32.gmra.mxu0 %v553
        %v626 = vpop.f32.mrf.mxu0
        %v627 = vadd.f32 %v577, %v626
        %628 = vmatmul.f32.gmra.mxu0 %v554
        %v629 = vpop.f32.mrf.mxu0
        %v630 = vadd.f32 %v577, %v629
        %631 = vmatmul.f32.gmra.mxu0 %v555
        %v632 = vpop.f32.mrf.mxu0
        %v633 = vadd.f32 %v577, %v632
        %634 = vmatmul.f32.gmra.mxu0 %v556
        %v635 = vpop.f32.mrf.mxu0
        %v636 = vadd.f32 %v577, %v635
        %637 = vmatmul.f32.gmra.mxu0 %v557
        %v638 = vpop.f32.mrf.mxu0
        %v639 = vadd.f32 %v577, %v638
        %640 = vmatmul.f32.gmra.mxu0 %v558
        %v641 = vpop.f32.mrf.mxu0
        %v642 = vadd.f32 %v577, %v641
        %643 = vdwg.mxu0
        %644 = vst [vmem:[%s284] sm:$0xff] %v597
        %645 = vst [vmem:[%s284 + $0x8] sm:$0xff] %v600
        %646 = vst [vmem:[%s284 + $0x10] sm:$0xff] %v603
        %647 = vst [vmem:[%s284 + $0x18] sm:$0xff] %v606
        %648 = vst [vmem:[%s284 + $0x20] sm:$0xff] %v609
        %649 = vst [vmem:[%s284 + $0x28] sm:$0xff] %v612
        %650 = vst [vmem:[%s284 + $0x30] sm:$0xff] %v615
        %651 = vst [vmem:[%s284 + $0x38] sm:$0xff] %v618
        %652 = vst [vmem:[%s284 + $0x40] sm:$0xff] %v621
        %653 = vst [vmem:[%s284 + $0x48] sm:$0xff] %v624
        %654 = vst [vmem:[%s284 + $0x50] sm:$0xff] %v627
        %655 = vst [vmem:[%s284 + $0x58] sm:$0xff] %v630
        %656 = vst [vmem:[%s284 + $0x60] sm:$0xff] %v633
        %657 = vst [vmem:[%s284 + $0x68] sm:$0xff] %v636
        %658 = vst [vmem:[%s284 + $0x70] sm:$0xff] %v639
        %659 = vst [vmem:[%s284 + $0x78] sm:$0xff] %v642
        %s660 = sand.u32 %s181, 1
        %s661 = scalar_lea.sflag [#allocation3], %s660
        %s662 = sand.u32 %s181, 1
        %s663 = smul.addr %s662, 128
        %s664 = scalar_lea.vmem [#allocation2], %s663
        // Predicated region
        $region49: #{tpu_custom_call.1} parent=47 // pred_check
          %p665 = pneg %p191
        $region50: #{tpu_custom_call.1} parent=47 // pred_check_branch
          %667 = sbr.rel (%p665) target = $region52
        $region51: #{tpu_custom_call.1} parent=47 // pred_region
          %s668 = smul.u32 16, %s21
          %s669 = ssub.s32 38, %s668
          %p670 = scmp.lt.s32.totalorder %s669, 16
          %s671 = scalar_select %p670, %s669, 16
          %s672 = smul.u32 8, %s671
          %s673 = ssub.s32 128, %s672
          %s674 = sshll.u32 %s673, 4
          %675 = vsyncadd %s661, %s674
          %p676 = scmp.ne.s32.totalorder 0, %s672
          %s677 = smul.addr %s668, 8
          %s678 = scalar_lea.hbm %s7, %s677
          %s679 = smul.u32 8, %s671
          %s680 = sshll.u32 %s664, 4
          %s681 = int_to_ptr.vmem [resolvable:$true] %s680
          %s682 = sshll.u32 %s678, 4
          %s683 = int_to_ptr.hbm [resolvable:$true] %s682
          %s684 = sshll.u32 %s679, 4
          %688 = dma.vmem_to_hbm [thread:$0]  (%p676), %s681, %s684, %s683, %s661, 128, 128, 8
        $region52: #{tpu_custom_call.1} parent=47 // pred_fallthru
          _
      $region48: #{tpu_custom_call.1} parent=5 // pred_fallthru
        _
      %p689 = scmp.le.s32.totalorder 2, %s16
      // Predicated region
      $region53: #{tpu_custom_call.1} parent=5 // pred_check
        %p690 = pneg %p689
      $region54: #{tpu_custom_call.1} parent=5 // pred_check_branch
        %692 = sbr.rel (%p690) target = $region56
      $region55: #{tpu_custom_call.1} parent=5 // pred_region
        %s693 = ssub.s32 %s16, 2
        // Predicated region
        $region57: #{tpu_custom_call.1} parent=55 // pred_check
          %p694 = pneg %p197
        $region58: #{tpu_custom_call.1} parent=55 // pred_check_branch
          %696 = sbr.rel (%p694) target = $region60
        $region59: #{tpu_custom_call.1} parent=55 // pred_region
          %s697 = sand.u32 %s182, 1
          %s698 = scalar_lea.sflag [#allocation3], %s697
          %s699 = sand.u32 %s182, 1
          %s700 = smul.addr %s699, 128
          %s701 = scalar_lea.vmem [#allocation2], %s700
          %703 = dma.done %s698, 2048
        $region60: #{tpu_custom_call.1} parent=55 // pred_fallthru
          _
      $region56: #{tpu_custom_call.1} parent=5 // pred_fallthru
        _
    $region6: #{tpu_custom_call.1} parent=1 // loop_footer
      %s20 = sadd.s32 1, %s16
    $region7: #{tpu_custom_call.1} parent=1 // loop_footer_branch
      %15 = sbr.rel target = $region3
    $region8: #{tpu_custom_call.1} parent=1 // loop_exit
      _
    %704 = vsyncpa [#allocation3], 1
    %s705 = scalar_lea.sflag [#allocation3], 1
    %706 = vsyncpa %s705, 1

</llo_original>
